<compile_context>
chip_gen: v6e
topology: v6e:2x2x1
jax: 0.10.0
libtpu: 0.0.40
codegen_flags: <defaults>
</compile_context>

<pallas_src>
import functools

import jax
import jax.numpy as jnp
from jax.experimental import pallas as pl
from jax.experimental.pallas import tpu as pltpu

BN_EPS = 1e-5

TILE_R_MAX = 1024        # patch rows per grid step (multiple of 8)
TILE_E_MAX = 512         # embed tile for the head (multiple of 128)
F32_TEMP_CAP = 8 << 20   # cap on the f32 (tile_r, tile_c) dot/ReLU temporary
VMEM_CAP = 48 << 20      # scoped-VMEM ceiling safe on v7x (64 MiB physical)


# ----------------------------- Pallas kernels ------------------------------

def conv_pool_kernel(p_ref, w_ref, o_ref, acc_ref, *, inv_hw):
    """Fused stem conv (im2col matmul, bias+mask folded into K) + ReLU + avg pool.

    Grid: (image n, C_feat tile c, row tile r) -- r is the reduction axis.
      p_ref:   (TILE_R, Kp)    bf16 im2col patches (+ ones-lane) of image n
      w_ref:   (Kp, TILE_C)    bf16 conv weights (+ bias row)
      o_ref:   (1, 1, TILE_C)  bf16 pooled features, written at last r
      acc_ref: (8, TILE_C)     f32 partial row-sums (VMEM scratch)
    """
    r = pl.program_id(2)

    @pl.when(r == 0)
    def _():
        acc_ref[...] = jnp.zeros_like(acc_ref)

    # Bias arrives through the MXU (ones-lane x bias-row); padded rows have a
    # zero ones-lane so they contribute ReLU(0) = 0 to the pool -> no mask.
    y = jnp.dot(p_ref[...], w_ref[...], preferred_element_type=jnp.float32)
    y = jnp.maximum(y, 0.0)                                   # f32 (v5e-friendly)

    # Partial sum kept as (8, tile_c): pure vreg adds, cross-sublane reduce
    # deferred to the finalize step.
    acc_ref[...] += jnp.sum(y.reshape(-1, 8, y.shape[1]), axis=0)

    @pl.when(r == pl.num_programs(2) - 1)
    def _():
        pooled = jnp.sum(acc_ref[...], axis=0, keepdims=True) * inv_hw
        o_ref[0] = pooled.astype(o_ref.dtype)


def head_kernel(f_ref, w_ref, b_ref, o_ref):
    """fc (with BatchNorm1d eval folded in) + ReLU; Dropout(0.5) is identity.

      f_ref: (N, C_feat)       bf16 pooled features
      w_ref: (C_feat, TILE_E)  bf16 BN-folded fc weights
      b_ref: (1, TILE_E)       f32 BN-folded fc bias
      o_ref: (N, TILE_E)       f32 output
    """
    y = jnp.dot(f_ref[...], w_ref[...], preferred_element_type=jnp.float32)
    o_ref[...] = jnp.maximum(y + b_ref[...], 0.0).astype(o_ref.dtype)


# ------------------------------ glue helpers -------------------------------

def _round_up(x, m):
    return ((x + m - 1) // m) * m


def _pick_tile(total, cap, mult):
    """Largest multiple of `mult` dividing `total`, at most `cap`."""
    t = min(cap, total)
    t -= t % mult
    while total % t != 0:
        t -= mult
    return t


def _vmem_limit(tile_bytes):
    # working set + headroom, clamped so the limit is valid on v5e/v6e/v7x.
    return int(min(max(tile_bytes + (8 << 20), 32 << 20), VMEM_CAP))


def _im2col(x_nhwc, kh, kw, stride):
    """Extract (kh,kw) patches with given stride (valid padding) -> (N, HW, K)."""
    n, h, w, c = x_nhwc.shape
    ho = (h - kh) // stride + 1
    wo = (w - kw) // stride + 1
    cols = []
    for i in range(kh):
        for j in range(kw):
            cols.append(
                x_nhwc[:, i:i + stride * ho:stride, j:j + stride * wo:stride, :])
    p = jnp.stack(cols, axis=-2)                 # (N, Ho, Wo, kh*kw, C)
    return p.reshape(n, ho * wo, kh * kw * c), ho, wo


@jax.jit
def inception_encoder_forward(images_nchw, params):
    """images_nchw: (N, C, H, W) float32, like the torch module."""
    # Cast once to bf16 before im2col: the patch matrix is materialized a
    # single time, already in the kernel's compute dtype.
    x = jnp.transpose(images_nchw, (0, 2, 3, 1)).astype(jnp.bfloat16)   # NHWC
    n = x.shape[0]

    # ---- stem conv (3x3, stride 2, valid) + fused global average pool ----
    patches, ho, wo = _im2col(x, 3, 3, stride=2)     # (N, HW, K) bf16
    hw = ho * wo
    k = patches.shape[-1]
    kp = _round_up(k + 1, 8)                         # +1 ones-lane (bias), 8-aligned

    c_feat = params["conv_w"].shape[0]               # torch layout (C_feat, C_in, 3, 3)
    assert c_feat % 128 == 0, "backbone feature width must be a multiple of 128"

    # Channel tiling: one block (patches read from HBM exactly once) unless the
    # megacore parallel extent would collapse to 1 (v7x, batch 1).
    tile_c = c_feat
    if n < 2 and c_feat % 256 == 0:
        tile_c = c_feat // 2

    tile_r = min(TILE_R_MAX, _round_up(hw, 8))
    while tile_r > 8 and tile_r * tile_c * 4 > F32_TEMP_CAP:
        tile_r = max(8, _round_up(tile_r // 2, 8))
    hw_pad = _round_up(hw, tile_r)
    n_rt = hw_pad // tile_r

    # Bias/mask fold: ones-lane = 1.0 for valid rows, 0.0 for hw-padding rows;
    # the matching weight row carries conv_b.
    ones_col = jnp.ones((n, hw, 1), jnp.bfloat16)
    patches = jnp.concatenate([patches, ones_col], axis=-1)          # (N, HW, K+1)
    patches = jnp.pad(patches, ((0, 0), (0, hw_pad - hw), (0, kp - (k + 1))))
    patches = patches.reshape(n * hw_pad, kp)                        # bf16, padded

    conv_w = jnp.transpose(params["conv_w"], (2, 3, 1, 0)).reshape(k, c_feat)
    conv_w = jnp.concatenate([conv_w, params["conv_b"].reshape(1, c_feat)], axis=0)
    conv_w = jnp.pad(conv_w, ((0, kp - (k + 1)), (0, 0))).astype(jnp.bfloat16)

    conv_tile_bytes = (2 * (tile_r * kp * 2 + kp * tile_c * 2)   # dbl-buffered inputs
                       + 2 * (tile_c * 2)                        # output block
                       + 8 * tile_c * 4                          # acc scratch
                       + 2 * tile_r * tile_c * 4)                # f32 dot/ReLU temps

    pooled = pl.pallas_call(
        functools.partial(conv_pool_kernel, inv_hw=float(1.0 / hw)),
        out_shape=jax.ShapeDtypeStruct((n, 1, c_feat), jnp.bfloat16),
        grid=(n, c_feat // tile_c, n_rt),
        in_specs=[
            pl.BlockSpec((tile_r, kp),
                         lambda ni, ci, ri, n_rt=n_rt: (ni * n_rt + ri, 0)),
            pl.BlockSpec((kp, tile_c), lambda ni, ci, ri: (0, ci)),
        ],
        out_specs=pl.BlockSpec((1, 1, tile_c), lambda ni, ci, ri: (ni, 0, ci)),
        scratch_shapes=[pltpu.VMEM((8, tile_c), jnp.float32)],
        compiler_params=pltpu.CompilerParams(
            dimension_semantics=("parallel", "parallel", "arbitrary"),
            vmem_limit_bytes=_vmem_limit(conv_tile_bytes)),
    )(patches, conv_w)

    pooled = pooled.reshape(n, c_feat)               # (N, C_feat) bf16

    # ---- head: fc + BatchNorm1d(eval, folded) + ReLU + Dropout(identity) ----
    e = params["fc_w"].shape[0]                      # torch layout (E, C_feat)
    e_pad = _round_up(e, 128)
    tile_e = _pick_tile(e_pad, TILE_E_MAX, 128)

    scale = params["bn_gamma"] * jax.lax.rsqrt(params["bn_rvar"] + BN_EPS)      # (E,)
    w_eff = jnp.transpose(params["fc_w"], (1, 0)) * scale[None, :]              # (C_feat, E)
    b_eff = (params["fc_b"] - params["bn_rmean"]) * scale + params["bn_beta"]   # (E,)

    w_eff = jnp.pad(w_eff, ((0, 0), (0, e_pad - e))).astype(jnp.bfloat16)
    b_eff = jnp.pad(b_eff, (0, e_pad - e)).reshape(1, e_pad).astype(jnp.float32)

    head_tile_bytes = (n * c_feat * 2                               # grid-invariant f
                       + 2 * (c_feat * tile_e * 2 + tile_e * 4 + n * tile_e * 4)
                       + n * tile_e * 4)                            # f32 temp

    out = pl.pallas_call(
        head_kernel,
        out_shape=jax.ShapeDtypeStruct((n, e_pad), jnp.float32),
        grid=(e_pad // tile_e,),
        in_specs=[
            pl.BlockSpec((n, c_feat), lambda j: (0, 0)),
            pl.BlockSpec((c_feat, tile_e), lambda j: (0, j)),
            pl.BlockSpec((1, tile_e), lambda j: (0, j)),
        ],
        out_specs=pl.BlockSpec((n, tile_e), lambda j: (0, j)),
        compiler_params=pltpu.CompilerParams(
            dimension_semantics=("parallel",),
            vmem_limit_bytes=_vmem_limit(head_tile_bytes)),
    )(pooled, w_eff, b_eff)

    return out[:, :e]


def make_params(key, c_in, c_feat, embed_size):
    """Deterministic synthetic parameters (torch layouts / shapes)."""
    ks = jax.random.split(key, 6)
    return {
        "conv_w": 0.1 * jax.random.normal(ks[0], (c_feat, c_in, 3, 3), jnp.float32),
        "conv_b": 0.1 * jax.random.normal(ks[1], (c_feat,), jnp.float32),
        "fc_w": 0.1 * jax.random.normal(ks[2], (embed_size, c_feat), jnp.float32),
        "fc_b": 0.1 * jax.random.normal(ks[3], (embed_size,), jnp.float32),
        "bn_gamma": jnp.ones((embed_size,), jnp.float32),
        "bn_beta": jnp.zeros((embed_size,), jnp.float32),
        "bn_rmean": 0.05 * jax.random.normal(ks[4], (embed_size,), jnp.float32),
        "bn_rvar": jnp.abs(1.0 + 0.05 * jax.random.normal(ks[5], (embed_size,),
                                                          jnp.float32)),
    }


# ------------------------------- references --------------------------------

def _reference_f32(images_nchw, params):
    """Pure-f32, unfolded math (matches the torch eval-mode module exactly)."""
    x = jnp.transpose(images_nchw, (0, 2, 3, 1)).astype(jnp.float32)
    patches, _, _ = _im2col(x, 3, 3, 2)
    c_feat = params["conv_w"].shape[0]
    k = patches.shape[-1]
    w = jnp.transpose(params["conv_w"], (2, 3, 1, 0)).reshape(k, c_feat)
    conv = jnp.maximum(
        jnp.einsum("nrk,kc->nrc", patches, w, precision="highest")
        + params["conv_b"], 0.0)
    pooled = conv.mean(axis=1)
    y = jnp.dot(pooled, params["fc_w"].T, precision="highest") + params["fc_b"]
    inv = params["bn_gamma"] * jax.lax.rsqrt(params["bn_rvar"] + BN_EPS)
    y = (y - params["bn_rmean"]) * inv + params["bn_beta"]
    return jnp.maximum(y, 0.0)


def _reference_bf16(images_nchw, params):
    """Same math with the same bf16 casts the kernels use (tight check)."""
    x = jnp.transpose(images_nchw, (0, 2, 3, 1)).astype(jnp.float32)
    patches, _, _ = _im2col(x, 3, 3, 2)
    c_feat = params["conv_w"].shape[0]
    k = patches.shape[-1]
    w = jnp.transpose(params["conv_w"], (2, 3, 1, 0)).reshape(k, c_feat)
    p_b = patches.astype(jnp.bfloat16).astype(jnp.float32)
    w_b = w.astype(jnp.bfloat16).astype(jnp.float32)
    b_b = params["conv_b"].astype(jnp.bfloat16).astype(jnp.float32)
    conv = jnp.maximum(
        jnp.einsum("nrk,kc->nrc", p_b, w_b, precision="highest") + b_b, 0.0)
    pooled = conv.mean(axis=1).astype(jnp.bfloat16).astype(jnp.float32)
    scale = params["bn_gamma"] * jax.lax.rsqrt(params["bn_rvar"] + BN_EPS)
    w_eff = (params["fc_w"].T * scale[None, :]).astype(jnp.bfloat16).astype(jnp.float32)
    b_eff = (params["fc_b"] - params["bn_rmean"]) * scale + params["bn_beta"]
    y = jnp.dot(pooled, w_eff, precision="highest") + b_eff
    return jnp.maximum(y, 0.0)


if __name__ == "__main__":
    # Small stand-in for 3x299x299 inception inputs: 35x35 -> 17x17 stem output,
    # exercising row padding (289 -> 296) and the folded bias/mask path.
    N, C_IN, H, W = 2, 3, 35, 35
    C_FEAT = 256        # stands in for inception fc.in_features (2048)
    EMBED = 256         # embed_size (multiple of 128 -> lane-dense head output)

    root = jax.random.PRNGKey(0)
    k_img, k_par = jax.random.split(root)
    images = jax.random.normal(k_img, (N, C_IN, H, W), jnp.float32)
    params = make_params(k_par, C_IN, C_FEAT, EMBED)

    out = jax.block_until_ready(inception_encoder_forward(images, params))
    assert out.shape == (N, EMBED)

    ref_tight = _reference_bf16(images, params)
    ref_f32 = _reference_f32(images, params)
    assert jnp.allclose(out, ref_tight, atol=2e-3, rtol=2e-3), \
        "mismatch vs bf16-matched reference"
    assert jnp.allclose(out, ref_f32, atol=2e-2, rtol=2e-2), \
        "mismatch vs f32 module reference"
    print("KERNEL_OK")
</pallas_src>

<mosaic_0001>
module attributes {stable_mosaic.version = 11 : i64} {
  func.func @conv_pool_kernel(%arg0: i32, %arg1: i32, %arg2: i32, %arg3: memref<296x32xbf16, #tpu.memory_space<vmem>>, %arg4: memref<32x256xbf16, #tpu.memory_space<vmem>>, %arg5: memref<1x1x256xbf16, #tpu.memory_space<vmem>>, %arg6: memref<8x256xf32, #tpu.memory_space<vmem>>) attributes {dimension_semantics = [#tpu.dimension_semantics<parallel>, #tpu.dimension_semantics<parallel>, #tpu.dimension_semantics<arbitrary>], iteration_bounds = array<i64: 2, 1, 1>, scalar_prefetch = 0 : i64, scratch_operands = 1 : i64, tpu.core_type = #tpu.core_type<tc>, window_params = [{transform_indices = @transform_0, window_bounds = array<i64: 296, 32>}, {transform_indices = @transform_1, window_bounds = array<i64: 32, 256>}, {transform_indices = @transform_2, window_bounds = array<i64: 1, 1, 256>}]} {
    %c0_i32 = arith.constant 0 : i32
    %0 = arith.cmpi eq, %arg2, %c0_i32 : i32
    %1 = arith.extui %0 : i1 to i32
    %c0_i32_0 = arith.constant 0 : i32
    %2 = arith.cmpi ne, %1, %c0_i32_0 : i32
    scf.if %2 {
      %cst_12 = arith.constant 0.000000e+00 : f32
      %16 = vector.broadcast %cst_12 : f32 to vector<8x256xf32>
      %c0_13 = arith.constant 0 : index
      %c0_14 = arith.constant 0 : index
      %17 = vector.load %arg6[%c0_13, %c0_14] : memref<8x256xf32, #tpu.memory_space<vmem>>, vector<8x256xf32>
      tpu.vector_store %arg6[%c0_13, %c0_14], %16 {strides = array<i32>} : memref<8x256xf32, #tpu.memory_space<vmem>>, vector<8x256xf32>,
    } else {
    }
    %c0 = arith.constant 0 : index
    %c0_1 = arith.constant 0 : index
    %3 = vector.load %arg3[%c0, %c0_1] : memref<296x32xbf16, #tpu.memory_space<vmem>>, vector<296x32xbf16>
    %c0_2 = arith.constant 0 : index
    %c0_3 = arith.constant 0 : index
    %4 = vector.load %arg4[%c0_2, %c0_3] : memref<32x256xbf16, #tpu.memory_space<vmem>>, vector<32x256xbf16>
    %cst = arith.constant dense<0.000000e+00> : vector<296x256xf32>
    %5 = tpu.matmul %3, %4, %cst {dimension_numbers = #tpu.dot_dimension_numbers<[1], [0], [0], [1], [0, 0, 1, 1], [], []>} : vector<296x32xbf16>, vector<32x256xbf16>, vector<296x256xf32> -> vector<296x256xf32>
    %cst_4 = arith.constant 0.000000e+00 : f32
    %6 = vector.broadcast %cst_4 : f32 to vector<296x256xf32>
    %7 = arith.maximumf %5, %6 : vector<296x256xf32>
    %c0_5 = arith.constant 0 : index
    %c0_6 = arith.constant 0 : index
    %8 = vector.load %arg6[%c0_5, %c0_6] : memref<8x256xf32, #tpu.memory_space<vmem>>, vector<8x256xf32>
    %9 = vector.shape_cast %7 : vector<296x256xf32> to vector<37x8x256xf32>
    %cst_7 = arith.constant dense<0.000000e+00> : vector<8x256xf32>
    %10 = vector.multi_reduction <add>, %9, %cst_7 [0] : vector<37x8x256xf32> to vector<8x256xf32>
    %11 = arith.addf %8, %10 : vector<8x256xf32>
    %c0_8 = arith.constant 0 : index
    %c0_9 = arith.constant 0 : index
    %12 = vector.load %arg6[%c0_8, %c0_9] : memref<8x256xf32, #tpu.memory_space<vmem>>, vector<8x256xf32>
    tpu.vector_store %arg6[%c0_8, %c0_9], %11 {strides = array<i32>} : memref<8x256xf32, #tpu.memory_space<vmem>>, vector<8x256xf32>,
    %c0_i32_10 = arith.constant 0 : i32
    %13 = arith.cmpi eq, %arg2, %c0_i32_10 : i32
    %14 = arith.extui %13 : i1 to i32
    %c0_i32_11 = arith.constant 0 : i32
    %15 = arith.cmpi ne, %14, %c0_i32_11 : i32
    scf.if %15 {
      %c0_12 = arith.constant 0 : index
      %c0_13 = arith.constant 0 : index
      %16 = vector.load %arg6[%c0_12, %c0_13] : memref<8x256xf32, #tpu.memory_space<vmem>>, vector<8x256xf32>
      %cst_14 = arith.constant dense<0.000000e+00> : vector<256xf32>
      %17 = vector.multi_reduction <add>, %16, %cst_14 [0] : vector<8x256xf32> to vector<256xf32>
      %18 = vector.shape_cast %17 : vector<256xf32> to vector<1x256xf32>
      %cst_15 = arith.constant 0.00346020772 : f32
      %19 = vector.broadcast %cst_15 : f32 to vector<1x256xf32>
      %20 = arith.mulf %18, %19 : vector<1x256xf32>
      %21 = arith.truncf %20 : vector<1x256xf32> to vector<1x256xbf16>
      %c0_16 = arith.constant 0 : index
      %c0_17 = arith.constant 0 : index
      %c0_18 = arith.constant 0 : index
      %22 = vector.load %arg5[%c0_16, %c0_17, %c0_18] : memref<1x1x256xbf16, #tpu.memory_space<vmem>>, vector<1x1x256xbf16>
      %23 = vector.shape_cast %22 : vector<1x1x256xbf16> to vector<1x256xbf16>
      %24 = vector.shape_cast %21 : vector<1x256xbf16> to vector<1x1x256xbf16>
      tpu.vector_store %arg5[%c0_16, %c0_17, %c0_18], %24 {strides = array<i32>} : memref<1x1x256xbf16, #tpu.memory_space<vmem>>, vector<1x1x256xbf16>,
    } else {
    }
    return
  }
  func.func @transform_0(%arg0: i32, %arg1: i32, %arg2: i32) -> (i32, i32) {
    %c1_i32 = arith.constant 1 : i32
    %0 = arith.muli %arg0, %c1_i32 : i32
    %1 = arith.addi %0, %arg2 : i32
    %c0_i32 = arith.constant 0 : i32
    %c0_i32_0 = arith.constant 0 : i32
    return %1, %c0_i32 : i32, i32
  }
  func.func @transform_1(%arg0: i32, %arg1: i32, %arg2: i32) -> (i32, i32) {
    %c0_i32 = arith.constant 0 : i32
    %c0_i32_0 = arith.constant 0 : i32
    return %c0_i32, %arg1 : i32, i32
  }
  func.func @transform_2(%arg0: i32, %arg1: i32, %arg2: i32) -> (i32, i32, i32) {
    %c0_i32 = arith.constant 0 : i32
    %c0_i32_0 = arith.constant 0 : i32
    return %arg0, %c0_i32, %arg1 : i32, i32, i32
  }
}

module attributes {stable_mosaic.version = 11 : i64} {
  func.func @head_kernel(%arg0: i32, %arg1: memref<2x256xbf16, #tpu.memory_space<vmem>>, %arg2: memref<256x256xbf16, #tpu.memory_space<vmem>>, %arg3: memref<1x256xf32, #tpu.memory_space<vmem>>, %arg4: memref<2x256xf32, #tpu.memory_space<vmem>>) attributes {dimension_semantics = [#tpu.dimension_semantics<parallel>], iteration_bounds = array<i64: 1>, scalar_prefetch = 0 : i64, scratch_operands = 0 : i64, tpu.core_type = #tpu.core_type<tc>, window_params = [{pipeline_mode = #tpu.pipeline_mode<synchronous>, transform_indices = @transform_0, window_bounds = array<i64: 2, 256>}, {transform_indices = @transform_1, window_bounds = array<i64: 256, 256>}, {transform_indices = @transform_2, window_bounds = array<i64: 1, 256>}, {transform_indices = @transform_3, window_bounds = array<i64: 2, 256>}]} {
    %c0 = arith.constant 0 : index
    %c0_0 = arith.constant 0 : index
    %0 = vector.load %arg1[%c0, %c0_0] : memref<2x256xbf16, #tpu.memory_space<vmem>>, vector<2x256xbf16>
    %c0_1 = arith.constant 0 : index
    %c0_2 = arith.constant 0 : index
    %1 = vector.load %arg2[%c0_1, %c0_2] : memref<256x256xbf16, #tpu.memory_space<vmem>>, vector<256x256xbf16>
    %cst = arith.constant dense<0.000000e+00> : vector<2x256xf32>
    %2 = tpu.matmul %0, %1, %cst {dimension_numbers = #tpu.dot_dimension_numbers<[1], [0], [0], [1], [0, 0, 1, 1], [], []>} : vector<2x256xbf16>, vector<256x256xbf16>, vector<2x256xf32> -> vector<2x256xf32>
    %c0_3 = arith.constant 0 : index
    %c0_4 = arith.constant 0 : index
    %3 = vector.load %arg3[%c0_3, %c0_4] : memref<1x256xf32, #tpu.memory_space<vmem>>, vector<1x256xf32>
    %4 = vector.broadcast %3 : vector<1x256xf32> to vector<2x256xf32>
    %5 = arith.addf %2, %4 : vector<2x256xf32>
    %cst_5 = arith.constant 0.000000e+00 : f32
    %6 = vector.broadcast %cst_5 : f32 to vector<2x256xf32>
    %7 = arith.maximumf %5, %6 : vector<2x256xf32>
    %c0_6 = arith.constant 0 : index
    %c0_7 = arith.constant 0 : index
    %8 = vector.load %arg4[%c0_6, %c0_7] : memref<2x256xf32, #tpu.memory_space<vmem>>, vector<2x256xf32>
    tpu.vector_store %arg4[%c0_6, %c0_7], %7 {strides = array<i32>} : memref<2x256xf32, #tpu.memory_space<vmem>>, vector<2x256xf32>,
    return
  }
  func.func @transform_0(%arg0: i32) -> (i32, i32) {
    %c0_i32 = arith.constant 0 : i32
    %c0_i32_0 = arith.constant 0 : i32
    %c0_i32_1 = arith.constant 0 : i32
    return %c0_i32, %c0_i32_0 : i32, i32
  }
  func.func @transform_1(%arg0: i32) -> (i32, i32) {
    %c0_i32 = arith.constant 0 : i32
    %c0_i32_0 = arith.constant 0 : i32
    return %c0_i32, %arg0 : i32, i32
  }
  func.func @transform_2(%arg0: i32) -> (i32, i32) {
    %c0_i32 = arith.constant 0 : i32
    %c0_i32_0 = arith.constant 0 : i32
    return %c0_i32, %arg0 : i32, i32
  }
  func.func @transform_3(%arg0: i32) -> (i32, i32) {
    %c0_i32 = arith.constant 0 : i32
    %c0_i32_0 = arith.constant 0 : i32
    return %c0_i32, %arg0 : i32, i32
  }
}

</mosaic_0001>

<llo_original>
// kernel: inception_encoder_forward.3
$region0: #{inception_encoder_forward.3}
  #allocation0 [shape = 'u32[]', space=smem, size = 0x4, offset = 0x4, fixed_abs, tag = 'smem constant byte address 0x4 - core index']
  #allocation1 [shape = 'u32[144,128]{1,0:T(1,128)}', space=vmem, size = 0x12000, scoped, tag = 'internal scratch']
  %s0 = inlined_call_operand.vmem [shape: bf16[2,256], index: 0, kind: input, shape index: {}]
  %s1 = inlined_call_operand.vmem [shape: bf16[256,256], index: 1, kind: input, shape index: {}]
  %s2 = inlined_call_operand.vmem [shape: f32[1,256], index: 2, kind: input, shape index: {}]
  %s3 = inlined_call_operand.hbm [shape: f32[2,256], index: 3, kind: output, shape index: {}]
  %s4 = sld [smem:[#allocation0]]
  $region22: #{inception_encoder_forward.3} parent=0
    _
  %s6 = ssub.s32 1, %s4
  %s7 = scalar_select 0, %s6, %s4
  $region1: #{inception_encoder_forward.3} parent=0
    #allocation2 [shape = 'u8[2048]{0}', space=vmem, size = 0x800, scoped, tag = 'output window, operand 0, single buffered']
    #allocation3 [shape = 's32[1]{0}', space=sflag, size = 0x4, scoped, tag = 'scoped memory for inception_encoder_forward.3']
    %8 = vsyncpa [#allocation3], 0
    // Predicated region
    $region2: #{inception_encoder_forward.3} parent=1 // pred_check
      _
    $region3: #{inception_encoder_forward.3} parent=1 // pred_check_branch
      %10 = sbr.rel (0) target = $region5
    $region4: #{inception_encoder_forward.3} parent=1 // pred_region
      _
    $region5: #{inception_encoder_forward.3} parent=1 // pred_fallthru
      _
    // Predicated region
    $region6: #{inception_encoder_forward.3} parent=1 // pred_check
      _
    $region7: #{inception_encoder_forward.3} parent=1 // pred_check_branch
      %12 = sbr.rel (0) target = $region9
    $region8: #{inception_encoder_forward.3} parent=1 // pred_region
      _
    $region9: #{inception_encoder_forward.3} parent=1 // pred_fallthru
      _
    // Predicated region
    $region10: #{inception_encoder_forward.3} parent=1 // pred_check
      _
    $region11: #{inception_encoder_forward.3} parent=1 // pred_check_branch
      %14 = sbr.rel (0) target = $region13
    $region12: #{inception_encoder_forward.3} parent=1 // pred_region
      _
    $region13: #{inception_encoder_forward.3} parent=1 // pred_fallthru
      _
    %v15 = vld [vmem:[%s0] sm:$0x3]
    %v16 = vld [vmem:[%s1] sm:$0xff]
    %v17 = vld [vmem:[%s1 + $0x8] sm:$0xff]
    %v18 = vld [vmem:[%s1 + $0x10] sm:$0xff]
    %v19 = vld [vmem:[%s1 + $0x18] sm:$0xff]
    %v20 = vld [vmem:[%s1 + $0x20] sm:$0xff]
    %v21 = vld [vmem:[%s1 + $0x28] sm:$0xff]
    %v22 = vld [vmem:[%s1 + $0x30] sm:$0xff]
    %v23 = vld [vmem:[%s1 + $0x38] sm:$0xff]
    %v24 = vld [vmem:[%s1 + $0x40] sm:$0xff]
    %v25 = vld [vmem:[%s1 + $0x48] sm:$0xff]
    %v26 = vld [vmem:[%s1 + $0x50] sm:$0xff]
    %v27 = vld [vmem:[%s1 + $0x58] sm:$0xff]
    %v28 = vld [vmem:[%s1 + $0x60] sm:$0xff]
    %v29 = vld [vmem:[%s1 + $0x68] sm:$0xff]
    %v30 = vld [vmem:[%s1 + $0x70] sm:$0xff]
    %v31 = vld [vmem:[%s1 + $0x78] sm:$0xff]
    %v32 = vld [vmem:[%s1 + $0x80] sm:$0xff]
    %v33 = vld [vmem:[%s1 + $0x88] sm:$0xff]
    %v34 = vld [vmem:[%s1 + $0x90] sm:$0xff]
    %v35 = vld [vmem:[%s1 + $0x98] sm:$0xff]
    %v36 = vld [vmem:[%s1 + $0xa0] sm:$0xff]
    %v37 = vld [vmem:[%s1 + $0xa8] sm:$0xff]
    %v38 = vld [vmem:[%s1 + $0xb0] sm:$0xff]
    %v39 = vld [vmem:[%s1 + $0xb8] sm:$0xff]
    %v40 = vld [vmem:[%s1 + $0xc0] sm:$0xff]
    %v41 = vld [vmem:[%s1 + $0xc8] sm:$0xff]
    %v42 = vld [vmem:[%s1 + $0xd0] sm:$0xff]
    %v43 = vld [vmem:[%s1 + $0xd8] sm:$0xff]
    %v44 = vld [vmem:[%s1 + $0xe0] sm:$0xff]
    %v45 = vld [vmem:[%s1 + $0xe8] sm:$0xff]
    %v46 = vld [vmem:[%s1 + $0xf0] sm:$0xff]
    %v47 = vld [vmem:[%s1 + $0xf8] sm:$0xff]
    %v48 = vld [vmem:[%s2] sm:$0x3]
    %v50 = vlaneseq
    %v51 = vshrl.u32 %v50, 7
    %v52 = vsub.s32 0, %v51
    %v53 = vrot.slane %v48, %v52
    %v54 = vlaneseq
    %v55 = vshrl.u32 %v54, 7
    %v56 = vsub.s32 1, %v55
    %v57 = vrot.slane %v48, %v56
    %v62 = vunpack.c.l.s4 1966171168
    %v63 = vunpack.c.0.s8 %v62
    %v64 = vlaneseq
    %v65 = vshrl.u32 %v64, 7
    %v66 = vsub.s32 %v63, %v65
    %v67 = vrot.slane %v15, %v66
    %v68 = vcombine.high %v67, %v67
    %v70 = vunpack.c.l.s4 1966171168
    %v71 = vunpack.c.0.s8 %v70
    %v72 = vlaneseq
    %v73 = vshrl.u32 %v72, 7
    %v74 = vsub.s32 %v71, %v73
    %v75 = vrot.slane %v67, %v74
    %v77 = vunpack.c.l.s4 1966171168
    %v78 = vunpack.c.0.s8 %v77
    %v79 = vlaneseq
    %v80 = vshrl.u32 %v79, 7
    %v81 = vsub.s32 %v78, %v80
    %v82 = vrot.slane %v68, %v81
    %v117 = vunpack.c.l.b16 %v16
    %v118 = vunpack.c.h.b16 %v16
    %v119 = vunpack.c.l.b16 %v17
    %v120 = vunpack.c.h.b16 %v17
    %v121 = vunpack.c.l.b16 %v18
    %v122 = vunpack.c.h.b16 %v18
    %v123 = vunpack.c.l.b16 %v19
    %v124 = vunpack.c.h.b16 %v19
    %v125 = vunpack.c.l.b16 %v20
    %v126 = vunpack.c.h.b16 %v20
    %v127 = vunpack.c.l.b16 %v21
    %v128 = vunpack.c.h.b16 %v21
    %v129 = vunpack.c.l.b16 %v22
    %v130 = vunpack.c.h.b16 %v22
    %v131 = vunpack.c.l.b16 %v23
    %v132 = vunpack.c.h.b16 %v23
    %v133 = vunpack.c.l.b16 %v24
    %v134 = vunpack.c.h.b16 %v24
    %v135 = vunpack.c.l.b16 %v25
    %v136 = vunpack.c.h.b16 %v25
    %v137 = vunpack.c.l.b16 %v26
    %v138 = vunpack.c.h.b16 %v26
    %v139 = vunpack.c.l.b16 %v27
    %v140 = vunpack.c.h.b16 %v27
    %v141 = vunpack.c.l.b16 %v28
    %v142 = vunpack.c.h.b16 %v28
    %v143 = vunpack.c.l.b16 %v29
    %v144 = vunpack.c.h.b16 %v29
    %v145 = vunpack.c.l.b16 %v30
    %v146 = vunpack.c.h.b16 %v30
    %v147 = vunpack.c.l.b16 %v31
    %v148 = vunpack.c.h.b16 %v31
    %v149 = vunpack.c.l.b16 %v32
    %v150 = vunpack.c.h.b16 %v32
    %v151 = vunpack.c.l.b16 %v33
    %v152 = vunpack.c.h.b16 %v33
    %v153 = vunpack.c.l.b16 %v34
    %v154 = vunpack.c.h.b16 %v34
    %v155 = vunpack.c.l.b16 %v35
    %v156 = vunpack.c.h.b16 %v35
    %v157 = vunpack.c.l.b16 %v36
    %v158 = vunpack.c.h.b16 %v36
    %v159 = vunpack.c.l.b16 %v37
    %v160 = vunpack.c.h.b16 %v37
    %v161 = vunpack.c.l.b16 %v38
    %v162 = vunpack.c.h.b16 %v38
    %v163 = vunpack.c.l.b16 %v39
    %v164 = vunpack.c.h.b16 %v39
    %v165 = vunpack.c.l.b16 %v40
    %v166 = vunpack.c.h.b16 %v40
    %v167 = vunpack.c.l.b16 %v41
    %v168 = vunpack.c.h.b16 %v41
    %v169 = vunpack.c.l.b16 %v42
    %v170 = vunpack.c.h.b16 %v42
    %v171 = vunpack.c.l.b16 %v43
    %v172 = vunpack.c.h.b16 %v43
    %v173 = vunpack.c.l.b16 %v44
    %v174 = vunpack.c.h.b16 %v44
    %v175 = vunpack.c.l.b16 %v45
    %v176 = vunpack.c.h.b16 %v45
    %v177 = vunpack.c.l.b16 %v46
    %v178 = vunpack.c.h.b16 %v46
    %v179 = vunpack.c.l.b16 %v47
    %v180 = vunpack.c.h.b16 %v47
    %v181 = vpack.c.b16 %v119, %v117
    %v182 = vpack.c.b16 %v120, %v118
    %v183 = vpack.c.b16 %v123, %v121
    %v184 = vpack.c.b16 %v124, %v122
    %v185 = vpack.c.b16 %v127, %v125
    %v186 = vpack.c.b16 %v128, %v126
    %v187 = vpack.c.b16 %v131, %v129
    %v188 = vpack.c.b16 %v132, %v130
    %v189 = vpack.c.b16 %v135, %v133
    %v190 = vpack.c.b16 %v136, %v134
    %v191 = vpack.c.b16 %v139, %v137
    %v192 = vpack.c.b16 %v140, %v138
    %v193 = vpack.c.b16 %v143, %v141
    %v194 = vpack.c.b16 %v144, %v142
    %v195 = vpack.c.b16 %v147, %v145
    %v196 = vpack.c.b16 %v148, %v146
    %v197 = vpack.c.b16 %v151, %v149
    %v198 = vpack.c.b16 %v152, %v150
    %v199 = vpack.c.b16 %v155, %v153
    %v200 = vpack.c.b16 %v156, %v154
    %v201 = vpack.c.b16 %v159, %v157
    %v202 = vpack.c.b16 %v160, %v158
    %v203 = vpack.c.b16 %v163, %v161
    %v204 = vpack.c.b16 %v164, %v162
    %v205 = vpack.c.b16 %v167, %v165
    %v206 = vpack.c.b16 %v168, %v166
    %v207 = vpack.c.b16 %v171, %v169
    %v208 = vpack.c.b16 %v172, %v170
    %v209 = vpack.c.b16 %v175, %v173
    %v210 = vpack.c.b16 %v176, %v174
    %v211 = vpack.c.b16 %v179, %v177
    %v212 = vpack.c.b16 %v180, %v178
    %245 = vmatprep.subr.bf16.mxu0 %v196
    %246 = vmatpush1.bf16.msra.mxu0 %v195
    %247 = vmatprep.subr.bf16.mxu0 %v194
    %248 = vmatpush1.bf16.msra.mxu0 %v193
    %249 = vmatprep.subr.bf16.mxu0 %v192
    %250 = vmatpush1.bf16.msra.mxu0 %v191
    %251 = vmatprep.subr.bf16.mxu0 %v190
    %252 = vmatpush1.bf16.msra.mxu0 %v189
    %253 = vmatprep.subr.bf16.mxu0 %v188
    %254 = vmatpush1.bf16.msra.mxu0 %v187
    %255 = vmatprep.subr.bf16.mxu0 %v186
    %256 = vmatpush1.bf16.msra.mxu0 %v185
    %257 = vmatprep.subr.bf16.mxu0 %v184
    %258 = vmatpush1.bf16.msra.mxu0 %v183
    %259 = vmatprep.subr.bf16.mxu0 %v182
    %260 = vmatpush1.bf16.msra.mxu0 %v181
    %261 = vmatprep.subr.bf16.mxu0 %v212
    %262 = vmatpush2.bf16.msra.mxu0 %v211
    %263 = vmatprep.subr.bf16.mxu0 %v210
    %264 = vmatpush2.bf16.msra.mxu0 %v209
    %265 = vmatprep.subr.bf16.mxu0 %v208
    %266 = vmatpush2.bf16.msra.mxu0 %v207
    %267 = vmatprep.subr.bf16.mxu0 %v206
    %268 = vmatpush2.bf16.msra.mxu0 %v205
    %269 = vmatprep.subr.bf16.mxu0 %v204
    %270 = vmatpush2.bf16.msra.mxu0 %v203
    %271 = vmatprep.subr.bf16.mxu0 %v202
    %272 = vmatpush2.bf16.msra.mxu0 %v201
    %273 = vmatprep.subr.bf16.mxu0 %v200
    %274 = vmatpush2.bf16.msra.mxu0 %v199
    %275 = vmatprep.subr.bf16.mxu0 %v198
    %276 = vmatpush2.bf16.msra.mxu0 %v197
    %277 = vmatprep.mubr.bf16.mxu0 %v82
    %278 = vmatmul.mubr.bf16.gmra.mxu0 %v75
    %v279 = vpop.f32.mrf.mxu0
    %v280 = vadd.f32 %v53, %v279
    %v281 = vpop.f32.mrf.mxu0
    %v282 = vadd.f32 %v57, %v281
    %v283 = vpop.f32.mrf.mxu0
    %v284 = vpop.f32.mrf.mxu0
    %285 = vdwg.mxu0
    %v286 = vmax.f32 %v280, 0.0
    %v287 = vmax.f32 %v282, 0.0
    %v290 = vcombine.low %v286, %v287
    %v292 = vunpack.c.l.s4 1983009808
    %v293 = vunpack.c.0.s8 %v292
    %v294 = vlaneseq
    %v295 = vshrl.u32 %v294, 7
    %v296 = vsub.s32 %v293, %v295
    %v297 = vrot.slane %v290, %v296
    %299 = vst [vmem:[#allocation2] sm:$0xf] %v297
    // Predicated region
    $region14: #{inception_encoder_forward.3} parent=1 // pred_check
      _
    $region15: #{inception_encoder_forward.3} parent=1 // pred_check_branch
      %301 = sbr.rel (0) target = $region17
    $region16: #{inception_encoder_forward.3} parent=1 // pred_region
      %s303 = ssub.s32 64, 64
      %304 = vsyncadd [#allocation3], %s303
      %s306 = sshll.u32 [#allocation2], 4
      %s307 = int_to_ptr.vmem [resolvable:$true] %s306
      %309 = dma.vmem_to_hbm [thread:$0]  %s307, 64, %s3, [#allocation3]
    $region17: #{inception_encoder_forward.3} parent=1 // pred_fallthru
      _
    // Predicated region
    $region18: #{inception_encoder_forward.3} parent=1 // pred_check
      _
    $region19: #{inception_encoder_forward.3} parent=1 // pred_check_branch
      %311 = sbr.rel (0) target = $region21
    $region20: #{inception_encoder_forward.3} parent=1 // pred_region
      %312 = dma.done [#allocation3], 64
    $region21: #{inception_encoder_forward.3} parent=1 // pred_fallthru
      _
    %313 = vsyncpa [#allocation3], 1

// kernel: inception_encoder_forward.2
$region0: #{inception_encoder_forward.2}
  #allocation0 [shape = 'u32[]', space=smem, size = 0x4, offset = 0x4, fixed_abs, tag = 'smem constant byte address 0x4 - core index']
  #allocation1 [shape = 'u32[144,128]{1,0:T(1,128)}', space=vmem, size = 0x12000, scoped, tag = 'internal scratch']
  #allocation2 [shape = 'f32[8,256]{1,0:T(8,128)}', space=vmem, size = 0x2000, scoped, tag = 'scratch operand']
  %s0 = inlined_call_operand.vmem [shape: bf16[592,32], index: 0, kind: input, shape index: {}]
  %s1 = inlined_call_operand.vmem [shape: bf16[32,256], index: 1, kind: input, shape index: {}]
  %s2 = inlined_call_operand.vmem [shape: bf16[2,1,256], index: 2, kind: output, shape index: {}]
  %s3 = sld [smem:[#allocation0]]
  $region49: #{inception_encoder_forward.2} parent=0
    _
  %s5 = ssub.s32 1, %s3
  %s6 = scalar_select 0, %s5, %s3
  loop: start=0, step=1, limit=4
  $region2: #{inception_encoder_forward.2} parent=0 // loop_pre_header
    _
  $region3: #{inception_encoder_forward.2} parent=0 // loop_header
    %s8 = sphi 0, %s12
    %p9 = scmp.ge.s32.totalorder %s8, 4
    %s15 = sphi 0, %s34
    %s16 = sphi 0, %s30
    %s17 = sphi 0, %s26
    %s18 = sphi 0, %s15
    %s19 = sphi 0, %s16
    %s20 = sphi 0, %s17
    %s21 = sphi 0, %s18
    %s22 = sphi 0, %s19
    %s23 = sphi 0, %s20
    %s39 = sphi 0, %s41
    %s42 = sphi 0, %s39
    %s43 = sphi 0, %s42
    %s59 = sphi 0, %s43
    %s65 = sphi 0, %s67
    %s68 = sphi 0, %s65
    %s69 = sphi 0, %s68
    %s85 = sphi 0, %s69
    %s93 = sphi 0, %s95
    %s96 = sphi 0, %s93
    %s97 = sphi 0, %s96
    %s113 = sphi 0, %s97
  $region4: #{inception_encoder_forward.2} parent=0 // loop_header_branch
    %11 = sbr.rel (%p9) target = $region8
  $region5: #{inception_encoder_forward.2} parent=0 // loop_body
    %s13 = ssub.s32 %s8, 1
    %s14 = ssub.s32 %s8, 2
    %s24 = sadd.s32 1, %s17
    %p25 = scmp.ge.s32.totalorder %s24, 1
    %s26 = scalar_select %p25, 0, %s24
    %s27 = sadd.s32 1, %s16
    %s28 = scalar_select %p25, %s27, %s16
    %p29 = scmp.ge.s32.totalorder %s28, 1
    %s30 = scalar_select %p29, 0, %s28
    %s31 = sadd.s32 1, %s15
    %s32 = scalar_select %p29, %s31, %s15
    %p33 = scmp.ge.s32.totalorder %s32, 2
    %s34 = scalar_select %p33, 0, %s32
    %s35 = sadd.s32 %s15, %s17
    %s36 = sadd.s32 %s34, %s26
    %s37 = ssub.s32 %s35, %s36
    %p38 = scmp.eq.s32.totalorder %s37, 0
    %s40 = sadd.s32 %s39, 1
    %s41 = scalar_select %p38, %s39, %s40
    %p44 = pneg %p38
    %p45 = scmp.eq.s32.totalorder %s8, 1
    %p46 = por %p44, %p45
    %p47 = scmp.ne.s32.totalorder %s39, %s42
    %p48 = scmp.eq.s32.totalorder %s8, 0
    %p49 = por %p47, %p48
    %p50 = scmp.ne.s32.totalorder %s39, %s42
    %p51 = scmp.eq.s32.totalorder %s13, 1
    %p52 = por %p50, %p51
    %p53 = scmp.ne.s32.totalorder %s42, %s43
    %p54 = scmp.eq.s32.totalorder %s13, 0
    %p55 = por %p53, %p54
    %p56 = scmp.ne.s32.totalorder %s42, %s43
    %p57 = scmp.eq.s32.totalorder %s14, 1
    %p58 = por %p56, %p57
    %p60 = scmp.ne.s32.totalorder %s43, %s59
    %p61 = scmp.eq.s32.totalorder %s14, 0
    %p62 = por %p60, %p61
    %s63 = ssub.s32 %s16, %s30
    %p64 = scmp.eq.s32.totalorder %s63, 0
    %s66 = sadd.s32 %s65, 1
    %s67 = scalar_select %p64, %s65, %s66
    %p70 = pneg %p64
    %p71 = scmp.eq.s32.totalorder %s8, 1
    %p72 = por %p70, %p71
    %p73 = scmp.ne.s32.totalorder %s65, %s68
    %p74 = scmp.eq.s32.totalorder %s8, 0
    %p75 = por %p73, %p74
    %p76 = scmp.ne.s32.totalorder %s65, %s68
    %p77 = scmp.eq.s32.totalorder %s13, 1
    %p78 = por %p76, %p77
    %p79 = scmp.ne.s32.totalorder %s68, %s69
    %p80 = scmp.eq.s32.totalorder %s13, 0
    %p81 = por %p79, %p80
    %p82 = scmp.ne.s32.totalorder %s68, %s69
    %p83 = scmp.eq.s32.totalorder %s14, 1
    %p84 = por %p82, %p83
    %p86 = scmp.ne.s32.totalorder %s69, %s85
    %p87 = scmp.eq.s32.totalorder %s14, 0
    %p88 = por %p86, %p87
    %s89 = ssub.s32 %s15, %s34
    %s90 = ssub.s32 %s16, %s30
    %s91 = sor.u32 %s89, %s90
    %p92 = scmp.eq.s32.totalorder %s91, 0
    %s94 = sadd.s32 %s93, 1
    %s95 = scalar_select %p92, %s93, %s94
    %p98 = pneg %p92
    %p99 = scmp.eq.s32.totalorder %s8, 1
    %p100 = por %p98, %p99
    %p101 = scmp.ne.s32.totalorder %s93, %s96
    %p102 = scmp.eq.s32.totalorder %s8, 0
    %p103 = por %p101, %p102
    %p104 = scmp.ne.s32.totalorder %s93, %s96
    %p105 = scmp.eq.s32.totalorder %s13, 1
    %p106 = por %p104, %p105
    %p107 = scmp.ne.s32.totalorder %s96, %s97
    %p108 = scmp.eq.s32.totalorder %s13, 0
    %p109 = por %p107, %p108
    %p110 = scmp.ne.s32.totalorder %s96, %s97
    %p111 = scmp.eq.s32.totalorder %s14, 1
    %p112 = por %p110, %p111
    %p114 = scmp.ne.s32.totalorder %s97, %s113
    %p115 = scmp.eq.s32.totalorder %s14, 0
    %p116 = por %p114, %p115
    %p117 = scmp.le.s32.totalorder 1, %s8
    %p118 = scmp.lt.s32.totalorder %s8, 3
    %p119 = pnand %p117, %p118
    %p120 = pneg %p119
    // Predicated region
    $region9: #{inception_encoder_forward.2} parent=5 // pred_check
      _
    $region10: #{inception_encoder_forward.2} parent=5 // pred_check_branch
      %122 = sbr.rel (%p119) target = $region12
    $region11: #{inception_encoder_forward.2} parent=5 // pred_region
      %s123 = ssub.s32 %s8, 1
      // Predicated region
      $region13: #{inception_encoder_forward.2} parent=11 // pred_check
        %p124 = pneg %p81
      $region14: #{inception_encoder_forward.2} parent=11 // pred_check_branch
        %126 = sbr.rel (%p124) target = $region16
      $region15: #{inception_encoder_forward.2} parent=11 // pred_region
        %s127 = smul.u32 2, %s19
        %p128 = scmp.lt.s32.totalorder %s127, 1
        %s129 = scalar_select %p128, %s127, 1
        %s130 = smul.addr %s129, 4
        %s131 = scalar_lea.vmem %s1, %s130
        %s132 = smul.u32 2, %s19
      $region16: #{inception_encoder_forward.2} parent=11 // pred_fallthru
        _
    $region12: #{inception_encoder_forward.2} parent=5 // pred_fallthru
      _
    %p133 = scmp.lt.s32.totalorder %s8, 2
    // Predicated region
    $region17: #{inception_encoder_forward.2} parent=5 // pred_check
      %p134 = pneg %p133
    $region18: #{inception_encoder_forward.2} parent=5 // pred_check_branch
      %136 = sbr.rel (%p134) target = $region20
    $region19: #{inception_encoder_forward.2} parent=5 // pred_region
      // Predicated region
      $region21: #{inception_encoder_forward.2} parent=19 // pred_check
        %p137 = pneg %p49
      $region22: #{inception_encoder_forward.2} parent=19 // pred_check_branch
        %139 = sbr.rel (%p137) target = $region24
      $region23: #{inception_encoder_forward.2} parent=19 // pred_region
        %s140 = sadd.s32 %s15, %s17
        %s141 = smul.u32 37, %s140
        %p142 = scmp.lt.s32.totalorder %s141, 73
        %s143 = scalar_select %p142, %s141, 73
        %s144 = smul.addr %s143, 4
        %s145 = scalar_lea.vmem %s0, %s144
        %s146 = sadd.s32 %s15, %s17
        %s147 = smul.u32 37, %s146
      $region24: #{inception_encoder_forward.2} parent=19 // pred_fallthru
        _
    $region20: #{inception_encoder_forward.2} parent=5 // pred_fallthru
      _
    %p148 = scmp.le.s32.totalorder 1, %s8
    %p149 = scmp.lt.s32.totalorder %s8, 3
    %p150 = pnand %p148, %p149
    %p151 = pneg %p150
    // Predicated region
    $region25: #{inception_encoder_forward.2} parent=5 // pred_check
      _
    $region26: #{inception_encoder_forward.2} parent=5 // pred_check_branch
      %153 = sbr.rel (%p150) target = $region28
    $region27: #{inception_encoder_forward.2} parent=5 // pred_region
      %s154 = ssub.s32 %s8, 1
      %s155 = sadd.s32 %s18, %s20
      %s156 = smul.u32 37, %s155
      %p157 = scmp.lt.s32.totalorder %s156, 73
      %s158 = scalar_select %p157, %s156, 73
      %s159 = smul.addr %s158, 4
      %s160 = scalar_lea.vmem %s0, %s159
      %p161 = pneg %p55
      %p162 = pneg %p52
      %s163 = smul.u32 2, %s19
      %p164 = scmp.lt.s32.totalorder %s163, 1
      %s165 = scalar_select %p164, %s163, 1
      %s166 = smul.addr %s165, 4
      %s167 = scalar_lea.vmem %s1, %s166
      %p168 = pneg %p81
      %p169 = pneg %p78
      %p170 = pneg %p109
      %p171 = pneg %p106
      %s172 = smul.u32 2, %s19
      %p173 = scmp.lt.s32.totalorder %s18, 1
      %s174 = scalar_select %p173, %s18, 1
      %p175 = scmp.lt.s32.totalorder %s172, 1
      %s176 = scalar_select %p175, %s172, 1
      %s177 = smul.addr %s174, 2
      %s178 = sadd.s32 %s176, %s177
      %s179 = scalar_lea.vmem %s2, %s178
      %s180 = sadd.s32 %s18, %s20
      %s181 = smul.u32 37, %s180
      %p182 = scmp.lt.s32.totalorder %s181, 73
      %s183 = scalar_select %p182, %s181, 73
      %s184 = smul.addr %s183, 4
      %s185 = scalar_lea.vmem %s0, %s184
      %s186 = sadd.s32 %s18, %s20
      %s187 = smul.u32 37, %s186
      %s188 = smul.u32 2, %s19
      %p189 = scmp.lt.s32.totalorder %s188, 1
      %s190 = scalar_select %p189, %s188, 1
      %s191 = smul.addr %s190, 4
      %s192 = scalar_lea.vmem %s1, %s191
      %s193 = smul.u32 2, %s19
      %s194 = smul.u32 2, %s19
      %p195 = scmp.lt.s32.totalorder %s18, 1
      %s196 = scalar_select %p195, %s18, 1
      %p197 = scmp.lt.s32.totalorder %s194, 1
      %s198 = scalar_select %p197, %s194, 1
      %s199 = smul.addr %s196, 2
      %s200 = sadd.s32 %s198, %s199
      %s201 = scalar_lea.vmem %s2, %s200
      %s202 = smul.u32 2, %s19
      %p204 = scmp.eq.s32.totalorder %s20, 0
      // Predicated region
      $region29: #{inception_encoder_forward.2} parent=27 // pred_check
        %p205 = pneg %p204
      $region30: #{inception_encoder_forward.2} parent=27 // pred_check_branch
        %207 = sbr.rel (%p205) target = $region32
      $region31: #{inception_encoder_forward.2} parent=27 // pred_region
        %208 = vst [vmem:[#allocation2] sm:$0xff] 0.0
        %209 = vst [vmem:[#allocation2 + $0x8] sm:$0xff] 0.0
      $region32: #{inception_encoder_forward.2} parent=27 // pred_fallthru
        _
      %v210 = vld [vmem:[%s185] sm:$0xf]
      %v211 = vld [vmem:[%s185 + $0x4] sm:$0xf]
      %v212 = vld [vmem:[%s185 + $0x8] sm:$0xf]
      %v213 = vld [vmem:[%s185 + $0xc] sm:$0xf]
      %v214 = vld [vmem:[%s185 + $0x10] sm:$0xf]
      %v215 = vld [vmem:[%s185 + $0x14] sm:$0xf]
      %v216 = vld [vmem:[%s185 + $0x18] sm:$0xf]
      %v217 = vld [vmem:[%s185 + $0x1c] sm:$0xf]
      %v218 = vld [vmem:[%s185 + $0x20] sm:$0xf]
      %v219 = vld [vmem:[%s185 + $0x24] sm:$0xf]
      %v220 = vld [vmem:[%s185 + $0x28] sm:$0xf]
      %v221 = vld [vmem:[%s185 + $0x2c] sm:$0xf]
      %v222 = vld [vmem:[%s185 + $0x30] sm:$0xf]
      %v223 = vld [vmem:[%s185 + $0x34] sm:$0xf]
      %v224 = vld [vmem:[%s185 + $0x38] sm:$0xf]
      %v225 = vld [vmem:[%s185 + $0x3c] sm:$0xf]
      %v226 = vld [vmem:[%s185 + $0x40] sm:$0xf]
      %v227 = vld [vmem:[%s185 + $0x44] sm:$0xf]
      %v228 = vld [vmem:[%s185 + $0x48] sm:$0xf]
      %v229 = vld [vmem:[%s185 + $0x4c] sm:$0xf]
      %v230 = vld [vmem:[%s185 + $0x50] sm:$0xf]
      %v231 = vld [vmem:[%s185 + $0x54] sm:$0xf]
      %v232 = vld [vmem:[%s185 + $0x58] sm:$0xf]
      %v233 = vld [vmem:[%s185 + $0x5c] sm:$0xf]
      %v234 = vld [vmem:[%s185 + $0x60] sm:$0xf]
      %v235 = vld [vmem:[%s185 + $0x64] sm:$0xf]
      %v236 = vld [vmem:[%s185 + $0x68] sm:$0xf]
      %v237 = vld [vmem:[%s185 + $0x6c] sm:$0xf]
      %v238 = vld [vmem:[%s185 + $0x70] sm:$0xf]
      %v239 = vld [vmem:[%s185 + $0x74] sm:$0xf]
      %v240 = vld [vmem:[%s185 + $0x78] sm:$0xf]
      %v241 = vld [vmem:[%s185 + $0x7c] sm:$0xf]
      %v242 = vld [vmem:[%s185 + $0x80] sm:$0xf]
      %v243 = vld [vmem:[%s185 + $0x84] sm:$0xf]
      %v244 = vld [vmem:[%s185 + $0x88] sm:$0xf]
      %v245 = vld [vmem:[%s185 + $0x8c] sm:$0xf]
      %v246 = vld [vmem:[%s185 + $0x90] sm:$0xf]
      %v247 = vld [vmem:[%s192] sm:$0xff]
      %v248 = vld [vmem:[%s192 + $0x8] sm:$0xff]
      %v249 = vld [vmem:[%s192 + $0x10] sm:$0xff]
      %v250 = vld [vmem:[%s192 + $0x18] sm:$0xff]
      %v288 = vunpack.c.l.b16 %v210
      %v289 = vunpack.c.l.b16 %v211
      %v290 = vunpack.c.l.b16 %v212
      %v291 = vunpack.c.l.b16 %v213
      %v292 = vunpack.c.l.b16 %v214
      %v293 = vunpack.c.l.b16 %v215
      %v294 = vunpack.c.l.b16 %v216
      %v295 = vunpack.c.l.b16 %v217
      %v296 = vunpack.c.l.b16 %v218
      %v297 = vunpack.c.l.b16 %v219
      %v298 = vunpack.c.l.b16 %v220
      %v299 = vunpack.c.l.b16 %v221
      %v300 = vunpack.c.l.b16 %v222
      %v301 = vunpack.c.l.b16 %v223
      %v302 = vunpack.c.l.b16 %v224
      %v303 = vunpack.c.l.b16 %v225
      %v304 = vunpack.c.l.b16 %v226
      %v305 = vunpack.c.l.b16 %v227
      %v306 = vunpack.c.l.b16 %v228
      %v307 = vunpack.c.l.b16 %v229
      %v308 = vunpack.c.l.b16 %v230
      %v309 = vunpack.c.l.b16 %v231
      %v310 = vunpack.c.l.b16 %v232
      %v311 = vunpack.c.l.b16 %v233
      %v312 = vunpack.c.l.b16 %v234
      %v313 = vunpack.c.l.b16 %v235
      %v314 = vunpack.c.l.b16 %v236
      %v315 = vunpack.c.l.b16 %v237
      %v316 = vunpack.c.l.b16 %v238
      %v317 = vunpack.c.l.b16 %v239
      %v318 = vunpack.c.l.b16 %v240
      %v319 = vunpack.c.l.b16 %v241
      %v320 = vunpack.c.l.b16 %v242
      %v321 = vunpack.c.l.b16 %v243
      %v322 = vunpack.c.l.b16 %v244
      %v323 = vunpack.c.l.b16 %v245
      %v324 = vunpack.c.l.b16 %v246
      %v325 = vpack.c.b16 %v289, %v288
      %v326 = vpack.c.b16 %v291, %v290
      %v327 = vpack.c.b16 %v293, %v292
      %v328 = vpack.c.b16 %v295, %v294
      %v329 = vpack.c.b16 %v297, %v296
      %v330 = vpack.c.b16 %v299, %v298
      %v331 = vpack.c.b16 %v301, %v300
      %v332 = vpack.c.b16 %v303, %v302
      %v333 = vpack.c.b16 %v305, %v304
      %v334 = vpack.c.b16 %v307, %v306
      %v335 = vpack.c.b16 %v309, %v308
      %v336 = vpack.c.b16 %v311, %v310
      %v337 = vpack.c.b16 %v313, %v312
      %v338 = vpack.c.b16 %v315, %v314
      %v339 = vpack.c.b16 %v317, %v316
      %v340 = vpack.c.b16 %v319, %v318
      %v341 = vpack.c.b16 %v321, %v320
      %v342 = vpack.c.b16 %v323, %v322
      %v343 = vpack.c.b16 %v324, %v324
      %v348 = vunpack.c.l.b16 %v247
      %v349 = vunpack.c.h.b16 %v247
      %v350 = vunpack.c.l.b16 %v248
      %v351 = vunpack.c.h.b16 %v248
      %v352 = vunpack.c.l.b16 %v249
      %v353 = vunpack.c.h.b16 %v249
      %v354 = vunpack.c.l.b16 %v250
      %v355 = vunpack.c.h.b16 %v250
      %v356 = vpack.c.b16 %v350, %v348
      %v357 = vpack.c.b16 %v351, %v349
      %v358 = vpack.c.b16 %v354, %v352
      %v359 = vpack.c.b16 %v355, %v353
      %vm364 = vcmask 261120
      %v366 = vsel %vm364, %v325, 0
      %v369 = vsel %vm364, %v326, 0
      %v372 = vsel %vm364, %v327, 0
      %v375 = vsel %vm364, %v328, 0
      %v378 = vsel %vm364, %v329, 0
      %v381 = vsel %vm364, %v330, 0
      %v384 = vsel %vm364, %v331, 0
      %v387 = vsel %vm364, %v332, 0
      %v390 = vsel %vm364, %v333, 0
      %v393 = vsel %vm364, %v334, 0
      %v396 = vsel %vm364, %v335, 0
      %v399 = vsel %vm364, %v336, 0
      %v402 = vsel %vm364, %v337, 0
      %v405 = vsel %vm364, %v338, 0
      %v408 = vsel %vm364, %v339, 0
      %v411 = vsel %vm364, %v340, 0
      %v414 = vsel %vm364, %v341, 0
      %v417 = vsel %vm364, %v342, 0
      %v420 = vsel %vm364, %v343, 0
      %422 = vmatprep.subr.bf16.mxu0 0
      %423 = vmatpush1.bf16.msra.mxu0 0
      %424 = vmatprep.subr.bf16.mxu0 0
      %425 = vmatpush1.bf16.msra.mxu0 0
      %426 = vmatprep.subr.bf16.mxu0 0
      %427 = vmatpush1.bf16.msra.mxu0 0
      %428 = vmatprep.subr.bf16.mxu0 0
      %429 = vmatpush1.bf16.msra.mxu0 0
      %430 = vmatprep.subr.bf16.mxu0 0
      %431 = vmatpush1.bf16.msra.mxu0 0
      %432 = vmatprep.subr.bf16.mxu0 0
      %433 = vmatpush1.bf16.msra.mxu0 0
      %434 = vmatprep.subr.bf16.mxu0 %v359
      %435 = vmatpush1.bf16.msra.mxu0 %v358
      %436 = vmatprep.subr.bf16.mxu0 %v357
      %437 = vmatpush1.bf16.msra.mxu0 %v356
      %438 = vmatprep.subr.bf16.mxu0 0
      %439 = vmatpush2.bf16.msra.mxu0 0
      %440 = vmatprep.subr.bf16.mxu0 0
      %441 = vmatpush2.bf16.msra.mxu0 0
      %442 = vmatprep.subr.bf16.mxu0 0
      %443 = vmatpush2.bf16.msra.mxu0 0
      %444 = vmatprep.subr.bf16.mxu0 0
      %445 = vmatpush2.bf16.msra.mxu0 0
      %446 = vmatprep.subr.bf16.mxu0 0
      %447 = vmatpush2.bf16.msra.mxu0 0
      %448 = vmatprep.subr.bf16.mxu0 0
      %449 = vmatpush2.bf16.msra.mxu0 0
      %450 = vmatprep.subr.bf16.mxu0 0
      %451 = vmatpush2.bf16.msra.mxu0 0
      %452 = vmatprep.subr.bf16.mxu0 0
      %453 = vmatpush2.bf16.msra.mxu0 0
      %454 = vmatprep.mubr.bf16.mxu0 0
      %455 = vmatmul.mubr.bf16.gmra.mxu0 %v366
      %v456 = vpop.f32.mrf.mxu0
      %v457 = vadd.f32 0.0, %v456
      %v458 = vpop.f32.mrf.mxu0
      %v459 = vadd.f32 0.0, %v458
      %v460 = vpop.f32.mrf.mxu0
      %v461 = vadd.f32 0.0, %v460
      %v462 = vpop.f32.mrf.mxu0
      %v463 = vadd.f32 0.0, %v462
      %464 = vmatprep.mubr.bf16.mxu0 0
      %465 = vmatmul.mubr.bf16.gmra.mxu0 %v369
      %v466 = vpop.f32.mrf.mxu0
      %v467 = vadd.f32 0.0, %v466
      %v468 = vpop.f32.mrf.mxu0
      %v469 = vadd.f32 0.0, %v468
      %v470 = vpop.f32.mrf.mxu0
      %v471 = vadd.f32 0.0, %v470
      %v472 = vpop.f32.mrf.mxu0
      %v473 = vadd.f32 0.0, %v472
      %474 = vmatprep.mubr.bf16.mxu0 0
      %475 = vmatmul.mubr.bf16.gmra.mxu0 %v372
      %v476 = vpop.f32.mrf.mxu0
      %v477 = vadd.f32 0.0, %v476
      %v478 = vpop.f32.mrf.mxu0
      %v479 = vadd.f32 0.0, %v478
      %v480 = vpop.f32.mrf.mxu0
      %v481 = vadd.f32 0.0, %v480
      %v482 = vpop.f32.mrf.mxu0
      %v483 = vadd.f32 0.0, %v482
      %484 = vmatprep.mubr.bf16.mxu0 0
      %485 = vmatmul.mubr.bf16.gmra.mxu0 %v375
      %v486 = vpop.f32.mrf.mxu0
      %v487 = vadd.f32 0.0, %v486
      %v488 = vpop.f32.mrf.mxu0
      %v489 = vadd.f32 0.0, %v488
      %v490 = vpop.f32.mrf.mxu0
      %v491 = vadd.f32 0.0, %v490
      %v492 = vpop.f32.mrf.mxu0
      %v493 = vadd.f32 0.0, %v492
      %494 = vmatprep.mubr.bf16.mxu0 0
      %495 = vmatmul.mubr.bf16.gmra.mxu0 %v378
      %v496 = vpop.f32.mrf.mxu0
      %v497 = vadd.f32 0.0, %v496
      %v498 = vpop.f32.mrf.mxu0
      %v499 = vadd.f32 0.0, %v498
      %v500 = vpop.f32.mrf.mxu0
      %v501 = vadd.f32 0.0, %v500
      %v502 = vpop.f32.mrf.mxu0
      %v503 = vadd.f32 0.0, %v502
      %504 = vmatprep.mubr.bf16.mxu0 0
      %505 = vmatmul.mubr.bf16.gmra.mxu0 %v381
      %v506 = vpop.f32.mrf.mxu0
      %v507 = vadd.f32 0.0, %v506
      %v508 = vpop.f32.mrf.mxu0
      %v509 = vadd.f32 0.0, %v508
      %v510 = vpop.f32.mrf.mxu0
      %v511 = vadd.f32 0.0, %v510
      %v512 = vpop.f32.mrf.mxu0
      %v513 = vadd.f32 0.0, %v512
      %514 = vmatprep.mubr.bf16.mxu0 0
      %515 = vmatmul.mubr.bf16.gmra.mxu0 %v384
      %v516 = vpop.f32.mrf.mxu0
      %v517 = vadd.f32 0.0, %v516
      %v518 = vpop.f32.mrf.mxu0
      %v519 = vadd.f32 0.0, %v518
      %v520 = vpop.f32.mrf.mxu0
      %v521 = vadd.f32 0.0, %v520
      %v522 = vpop.f32.mrf.mxu0
      %v523 = vadd.f32 0.0, %v522
      %524 = vmatprep.mubr.bf16.mxu0 0
      %525 = vmatmul.mubr.bf16.gmra.mxu0 %v387
      %v526 = vpop.f32.mrf.mxu0
      %v527 = vadd.f32 0.0, %v526
      %v528 = vpop.f32.mrf.mxu0
      %v529 = vadd.f32 0.0, %v528
      %v530 = vpop.f32.mrf.mxu0
      %v531 = vadd.f32 0.0, %v530
      %v532 = vpop.f32.mrf.mxu0
      %v533 = vadd.f32 0.0, %v532
      %534 = vmatprep.mubr.bf16.mxu0 0
      %535 = vmatmul.mubr.bf16.gmra.mxu0 %v390
      %v536 = vpop.f32.mrf.mxu0
      %v537 = vadd.f32 0.0, %v536
      %v538 = vpop.f32.mrf.mxu0
      %v539 = vadd.f32 0.0, %v538
      %v540 = vpop.f32.mrf.mxu0
      %v541 = vadd.f32 0.0, %v540
      %v542 = vpop.f32.mrf.mxu0
      %v543 = vadd.f32 0.0, %v542
      %544 = vmatprep.mubr.bf16.mxu0 0
      %545 = vmatmul.mubr.bf16.gmra.mxu0 %v393
      %v546 = vpop.f32.mrf.mxu0
      %v547 = vadd.f32 0.0, %v546
      %v548 = vpop.f32.mrf.mxu0
      %v549 = vadd.f32 0.0, %v548
      %v550 = vpop.f32.mrf.mxu0
      %v551 = vadd.f32 0.0, %v550
      %v552 = vpop.f32.mrf.mxu0
      %v553 = vadd.f32 0.0, %v552
      %554 = vmatprep.mubr.bf16.mxu0 0
      %555 = vmatmul.mubr.bf16.gmra.mxu0 %v396
      %v556 = vpop.f32.mrf.mxu0
      %v557 = vadd.f32 0.0, %v556
      %v558 = vpop.f32.mrf.mxu0
      %v559 = vadd.f32 0.0, %v558
      %v560 = vpop.f32.mrf.mxu0
      %v561 = vadd.f32 0.0, %v560
      %v562 = vpop.f32.mrf.mxu0
      %v563 = vadd.f32 0.0, %v562
      %564 = vmatprep.mubr.bf16.mxu0 0
      %565 = vmatmul.mubr.bf16.gmra.mxu0 %v399
      %v566 = vpop.f32.mrf.mxu0
      %v567 = vadd.f32 0.0, %v566
      %v568 = vpop.f32.mrf.mxu0
      %v569 = vadd.f32 0.0, %v568
      %v570 = vpop.f32.mrf.mxu0
      %v571 = vadd.f32 0.0, %v570
      %v572 = vpop.f32.mrf.mxu0
      %v573 = vadd.f32 0.0, %v572
      %574 = vmatprep.mubr.bf16.mxu0 0
      %575 = vmatmul.mubr.bf16.gmra.mxu0 %v402
      %v576 = vpop.f32.mrf.mxu0
      %v577 = vadd.f32 0.0, %v576
      %v578 = vpop.f32.mrf.mxu0
      %v579 = vadd.f32 0.0, %v578
      %v580 = vpop.f32.mrf.mxu0
      %v581 = vadd.f32 0.0, %v580
      %v582 = vpop.f32.mrf.mxu0
      %v583 = vadd.f32 0.0, %v582
      %584 = vmatprep.mubr.bf16.mxu0 0
      %585 = vmatmul.mubr.bf16.gmra.mxu0 %v405
      %v586 = vpop.f32.mrf.mxu0
      %v587 = vadd.f32 0.0, %v586
      %v588 = vpop.f32.mrf.mxu0
      %v589 = vadd.f32 0.0, %v588
      %v590 = vpop.f32.mrf.mxu0
      %v591 = vadd.f32 0.0, %v590
      %v592 = vpop.f32.mrf.mxu0
      %v593 = vadd.f32 0.0, %v592
      %594 = vmatprep.mubr.bf16.mxu0 0
      %595 = vmatmul.mubr.bf16.gmra.mxu0 %v408
      %v596 = vpop.f32.mrf.mxu0
      %v597 = vadd.f32 0.0, %v596
      %v598 = vpop.f32.mrf.mxu0
      %v599 = vadd.f32 0.0, %v598
      %v600 = vpop.f32.mrf.mxu0
      %v601 = vadd.f32 0.0, %v600
      %v602 = vpop.f32.mrf.mxu0
      %v603 = vadd.f32 0.0, %v602
      %604 = vmatprep.mubr.bf16.mxu0 0
      %605 = vmatmul.mubr.bf16.gmra.mxu0 %v411
      %v606 = vpop.f32.mrf.mxu0
      %v607 = vadd.f32 0.0, %v606
      %v608 = vpop.f32.mrf.mxu0
      %v609 = vadd.f32 0.0, %v608
      %v610 = vpop.f32.mrf.mxu0
      %v611 = vadd.f32 0.0, %v610
      %v612 = vpop.f32.mrf.mxu0
      %v613 = vadd.f32 0.0, %v612
      %614 = vmatprep.mubr.bf16.mxu0 0
      %615 = vmatmul.mubr.bf16.gmra.mxu0 %v414
      %v616 = vpop.f32.mrf.mxu0
      %v617 = vadd.f32 0.0, %v616
      %v618 = vpop.f32.mrf.mxu0
      %v619 = vadd.f32 0.0, %v618
      %v620 = vpop.f32.mrf.mxu0
      %v621 = vadd.f32 0.0, %v620
      %v622 = vpop.f32.mrf.mxu0
      %v623 = vadd.f32 0.0, %v622
      %624 = vmatprep.mubr.bf16.mxu0 0
      %625 = vmatmul.mubr.bf16.gmra.mxu0 %v417
      %v626 = vpop.f32.mrf.mxu0
      %v627 = vadd.f32 0.0, %v626
      %v628 = vpop.f32.mrf.mxu0
      %v629 = vadd.f32 0.0, %v628
      %v630 = vpop.f32.mrf.mxu0
      %v631 = vadd.f32 0.0, %v630
      %v632 = vpop.f32.mrf.mxu0
      %v633 = vadd.f32 0.0, %v632
      %634 = vmatprep.mubr.bf16.mxu0 0
      %635 = vmatmul.mubr.bf16.gmra.mxu0 %v420
      %v636 = vpop.f32.mrf.mxu0
      %v637 = vadd.f32 0.0, %v636
      %v638 = vpop.f32.mrf.mxu0
      %v639 = vadd.f32 0.0, %v638
      %v640 = vpop.f32.mrf.mxu0
      %v641 = vpop.f32.mrf.mxu0
      %642 = vdwg.mxu0
      %v643 = vmax.f32 %v457, 0.0
      %v644 = vmax.f32 %v459, 0.0
      %v645 = vmax.f32 %v461, 0.0
      %v646 = vmax.f32 %v463, 0.0
      %v647 = vmax.f32 %v467, 0.0
      %v648 = vmax.f32 %v469, 0.0
      %v649 = vmax.f32 %v471, 0.0
      %v650 = vmax.f32 %v473, 0.0
      %v651 = vmax.f32 %v477, 0.0
      %v652 = vmax.f32 %v479, 0.0
      %v653 = vmax.f32 %v481, 0.0
      %v654 = vmax.f32 %v483, 0.0
      %v655 = vmax.f32 %v487, 0.0
      %v656 = vmax.f32 %v489, 0.0
      %v657 = vmax.f32 %v491, 0.0
      %v658 = vmax.f32 %v493, 0.0
      %v659 = vmax.f32 %v497, 0.0
      %v660 = vmax.f32 %v499, 0.0
      %v661 = vmax.f32 %v501, 0.0
      %v662 = vmax.f32 %v503, 0.0
      %v663 = vmax.f32 %v507, 0.0
      %v664 = vmax.f32 %v509, 0.0
      %v665 = vmax.f32 %v511, 0.0
      %v666 = vmax.f32 %v513, 0.0
      %v667 = vmax.f32 %v517, 0.0
      %v668 = vmax.f32 %v519, 0.0
      %v669 = vmax.f32 %v521, 0.0
      %v670 = vmax.f32 %v523, 0.0
      %v671 = vmax.f32 %v527, 0.0
      %v672 = vmax.f32 %v529, 0.0
      %v673 = vmax.f32 %v531, 0.0
      %v674 = vmax.f32 %v533, 0.0
      %v675 = vmax.f32 %v537, 0.0
      %v676 = vmax.f32 %v539, 0.0
      %v677 = vmax.f32 %v541, 0.0
      %v678 = vmax.f32 %v543, 0.0
      %v679 = vmax.f32 %v547, 0.0
      %v680 = vmax.f32 %v549, 0.0
      %v681 = vmax.f32 %v551, 0.0
      %v682 = vmax.f32 %v553, 0.0
      %v683 = vmax.f32 %v557, 0.0
      %v684 = vmax.f32 %v559, 0.0
      %v685 = vmax.f32 %v561, 0.0
      %v686 = vmax.f32 %v563, 0.0
      %v687 = vmax.f32 %v567, 0.0
      %v688 = vmax.f32 %v569, 0.0
      %v689 = vmax.f32 %v571, 0.0
      %v690 = vmax.f32 %v573, 0.0
      %v691 = vmax.f32 %v577, 0.0
      %v692 = vmax.f32 %v579, 0.0
      %v693 = vmax.f32 %v581, 0.0
      %v694 = vmax.f32 %v583, 0.0
      %v695 = vmax.f32 %v587, 0.0
      %v696 = vmax.f32 %v589, 0.0
      %v697 = vmax.f32 %v591, 0.0
      %v698 = vmax.f32 %v593, 0.0
      %v699 = vmax.f32 %v597, 0.0
      %v700 = vmax.f32 %v599, 0.0
      %v701 = vmax.f32 %v601, 0.0
      %v702 = vmax.f32 %v603, 0.0
      %v703 = vmax.f32 %v607, 0.0
      %v704 = vmax.f32 %v609, 0.0
      %v705 = vmax.f32 %v611, 0.0
      %v706 = vmax.f32 %v613, 0.0
      %v707 = vmax.f32 %v617, 0.0
      %v708 = vmax.f32 %v619, 0.0
      %v709 = vmax.f32 %v621, 0.0
      %v710 = vmax.f32 %v623, 0.0
      %v711 = vmax.f32 %v627, 0.0
      %v712 = vmax.f32 %v629, 0.0
      %v713 = vmax.f32 %v631, 0.0
      %v714 = vmax.f32 %v633, 0.0
      %v715 = vmax.f32 %v637, 0.0
      %v716 = vmax.f32 %v639, 0.0
      %v717 = vld [vmem:[#allocation2] sm:$0xff]
      %v718 = vld [vmem:[#allocation2 + $0x8] sm:$0xff]
      %v719 = vadd.f32 %v643, %v645
      %v720 = vadd.f32 %v719, %v647
      %v721 = vadd.f32 %v720, %v649
      %v722 = vadd.f32 %v721, %v651
      %v723 = vadd.f32 %v722, %v653
      %v724 = vadd.f32 %v723, %v655
      %v725 = vadd.f32 %v724, %v657
      %v726 = vadd.f32 %v725, %v659
      %v727 = vadd.f32 %v726, %v661
      %v728 = vadd.f32 %v727, %v663
      %v729 = vadd.f32 %v728, %v665
      %v730 = vadd.f32 %v729, %v667
      %v731 = vadd.f32 %v730, %v669
      %v732 = vadd.f32 %v731, %v671
      %v733 = vadd.f32 %v732, %v673
      %v734 = vadd.f32 %v733, %v675
      %v735 = vadd.f32 %v734, %v677
      %v736 = vadd.f32 %v735, %v679
      %v737 = vadd.f32 %v736, %v681
      %v738 = vadd.f32 %v737, %v683
      %v739 = vadd.f32 %v738, %v685
      %v740 = vadd.f32 %v739, %v687
      %v741 = vadd.f32 %v740, %v689
      %v742 = vadd.f32 %v741, %v691
      %v743 = vadd.f32 %v742, %v693
      %v744 = vadd.f32 %v743, %v695
      %v745 = vadd.f32 %v744, %v697
      %v746 = vadd.f32 %v745, %v699
      %v747 = vadd.f32 %v746, %v701
      %v748 = vadd.f32 %v747, %v703
      %v749 = vadd.f32 %v748, %v705
      %v750 = vadd.f32 %v749, %v707
      %v751 = vadd.f32 %v750, %v709
      %v752 = vadd.f32 %v751, %v711
      %v753 = vadd.f32 %v752, %v713
      %v754 = vadd.f32 %v753, %v715
      %v755 = vadd.f32 %v644, %v646
      %v756 = vadd.f32 %v755, %v648
      %v757 = vadd.f32 %v756, %v650
      %v758 = vadd.f32 %v757, %v652
      %v759 = vadd.f32 %v758, %v654
      %v760 = vadd.f32 %v759, %v656
      %v761 = vadd.f32 %v760, %v658
      %v762 = vadd.f32 %v761, %v660
      %v763 = vadd.f32 %v762, %v662
      %v764 = vadd.f32 %v763, %v664
      %v765 = vadd.f32 %v764, %v666
      %v766 = vadd.f32 %v765, %v668
      %v767 = vadd.f32 %v766, %v670
      %v768 = vadd.f32 %v767, %v672
      %v769 = vadd.f32 %v768, %v674
      %v770 = vadd.f32 %v769, %v676
      %v771 = vadd.f32 %v770, %v678
      %v772 = vadd.f32 %v771, %v680
      %v773 = vadd.f32 %v772, %v682
      %v774 = vadd.f32 %v773, %v684
      %v775 = vadd.f32 %v774, %v686
      %v776 = vadd.f32 %v775, %v688
      %v777 = vadd.f32 %v776, %v690
      %v778 = vadd.f32 %v777, %v692
      %v779 = vadd.f32 %v778, %v694
      %v780 = vadd.f32 %v779, %v696
      %v781 = vadd.f32 %v780, %v698
      %v782 = vadd.f32 %v781, %v700
      %v783 = vadd.f32 %v782, %v702
      %v784 = vadd.f32 %v783, %v704
      %v785 = vadd.f32 %v784, %v706
      %v786 = vadd.f32 %v785, %v708
      %v787 = vadd.f32 %v786, %v710
      %v788 = vadd.f32 %v787, %v712
      %v789 = vadd.f32 %v788, %v714
      %v790 = vadd.f32 %v789, %v716
      %v791 = vadd.f32 %v717, %v754
      %v792 = vadd.f32 %v718, %v790
      %793 = vst [vmem:[#allocation2] sm:$0xff] %v791
      %794 = vst [vmem:[#allocation2 + $0x8] sm:$0xff] %v792
      // Predicated region
      $region33: #{inception_encoder_forward.2} parent=27 // pred_check
        %p795 = pneg %p204
      $region34: #{inception_encoder_forward.2} parent=27 // pred_check_branch
        %797 = sbr.rel (%p795) target = $region36
      $region35: #{inception_encoder_forward.2} parent=27 // pred_region
        %v798 = vld [vmem:[#allocation2] sm:$0xff]
        %v799 = vld [vmem:[#allocation2 + $0x8] sm:$0xff]
        %v800 = vrot.slane %v798, 4
        %v801 = vadd.f32 %v798, %v800
        %v802 = vrot.slane %v801, 2
        %v803 = vadd.f32 %v801, %v802
        %v804 = vrot.slane %v803, 1
        %v805 = vadd.f32 %v803, %v804
        %v806 = vrot.slane %v799, 4
        %v807 = vadd.f32 %v799, %v806
        %v808 = vrot.slane %v807, 2
        %v809 = vadd.f32 %v807, %v808
        %v810 = vrot.slane %v809, 1
        %v811 = vadd.f32 %v809, %v810
        %v812 = vmul.f32 %v805, 0.0034602077
        %v813 = vmul.f32 %v811, 0.0034602077
        %v814 = vpack.c.bf16 %v812, %v812
        %v815 = vpack.c.bf16 %v813, %v813
        %v818 = vcombine.low %v814, %v815
        %v820 = vunpack.c.l.s4 1966171168
        %v821 = vunpack.c.0.s8 %v820
        %v822 = vlaneseq
        %v823 = vshrl.u32 %v822, 7
        %v824 = vsub.s32 %v821, %v823
        %v825 = vrot.slane %v818, %v824
        %v827 = vunpack.c.l.s4 1966171168
        %v828 = vunpack.c.0.s8 %v827
        %v829 = vlaneseq
        %v830 = vshrl.u32 %v829, 7
        %v831 = vsub.s32 %v828, %v830
        %v832 = vrot.slane %v825, %v831
        %vm834 = vcmask 1040384
        %vm835 = vsmask.f32 256
        %vm836 = vmand %vm834, %vm835
        %vm837 = vcmask 1041409
        %vm838 = vsmask.f32 1280
        %vm839 = vmand %vm837, %vm838
        %vm840 = vmor %vm839, %vm836
        %v841 = vld [vmem:[%s201] sm:$0x3]
        %v842 = vsel %vm840, %v832, %v841
        %843 = vst [vmem:[%s201] sm:$0x3] %v842
      $region36: #{inception_encoder_forward.2} parent=27 // pred_fallthru
        _
      %s844 = smul.u32 2, %s19
      %p845 = scmp.lt.s32.totalorder %s18, 1
      %s846 = scalar_select %p845, %s18, 1
      %p847 = scmp.lt.s32.totalorder %s844, 1
      %s848 = scalar_select %p847, %s844, 1
      %s849 = smul.addr %s846, 2
      %s850 = sadd.s32 %s848, %s849
      %s851 = scalar_lea.vmem %s2, %s850
      // Predicated region
      $region37: #{inception_encoder_forward.2} parent=27 // pred_check
        %p852 = pneg %p106
      $region38: #{inception_encoder_forward.2} parent=27 // pred_check_branch
        %854 = sbr.rel (%p852) target = $region40
      $region39: #{inception_encoder_forward.2} parent=27 // pred_region
        %s855 = smul.u32 2, %s19
      $region40: #{inception_encoder_forward.2} parent=27 // pred_fallthru
        _
    $region28: #{inception_encoder_forward.2} parent=5 // pred_fallthru
      _
    %p856 = scmp.le.s32.totalorder 2, %s8
    // Predicated region
    $region41: #{inception_encoder_forward.2} parent=5 // pred_check
      %p857 = pneg %p856
    $region42: #{inception_encoder_forward.2} parent=5 // pred_check_branch
      %859 = sbr.rel (%p857) target = $region44
    $region43: #{inception_encoder_forward.2} parent=5 // pred_region
      %s860 = ssub.s32 %s8, 2
      // Predicated region
      $region45: #{inception_encoder_forward.2} parent=43 // pred_check
        %p861 = pneg %p112
      $region46: #{inception_encoder_forward.2} parent=43 // pred_check_branch
        %863 = sbr.rel (%p861) target = $region48
      $region47: #{inception_encoder_forward.2} parent=43 // pred_region
        %s864 = smul.u32 2, %s22
        %p865 = scmp.lt.s32.totalorder %s21, 1
        %s866 = scalar_select %p865, %s21, 1
        %p867 = scmp.lt.s32.totalorder %s864, 1
        %s868 = scalar_select %p867, %s864, 1
        %s869 = smul.addr %s866, 2
        %s870 = sadd.s32 %s868, %s869
        %s871 = scalar_lea.vmem %s2, %s870
      $region48: #{inception_encoder_forward.2} parent=43 // pred_fallthru
        _
    $region44: #{inception_encoder_forward.2} parent=5 // pred_fallthru
      _
  $region6: #{inception_encoder_forward.2} parent=0 // loop_footer
    %s12 = sadd.s32 1, %s8
  $region7: #{inception_encoder_forward.2} parent=0 // loop_footer_branch
    %7 = sbr.rel target = $region3
  $region8: #{inception_encoder_forward.2} parent=0 // loop_exit
    _

</llo_original>
